<compile_context>
chip_gen: v5e
topology: v5e:2x2
jax: 0.10.0
libtpu: 0.0.40
codegen_flags: <defaults>
</compile_context>

<pallas_src>
import jax
import jax.numpy as jnp
from jax.experimental import pallas as pl
from jax.experimental.pallas import tpu as pltpu


# ---------------------------------------------------------------------------
# Kernels
# ---------------------------------------------------------------------------

def _linear_resident_kernel(x_ref, w_ref, b_ref, o_ref):
    # x_ref: (TM, D)   streamed token tile
    # w_ref: (D,  D)   full weight in [in, out] layout, VMEM-resident
    # b_ref: (1,  D)   bias row (float32)
    # o_ref: (TM, D)   output tile
    o_ref[...] = (
        jnp.dot(x_ref[...], w_ref[...], preferred_element_type=jnp.float32)
        + b_ref[...]
    ).astype(o_ref.dtype)


def _linear_tiled_kernel(x_ref, w_ref, b_ref, o_ref, acc_ref):
    # General path (weight does not fit VMEM-resident).
    # x_ref:   (TM, TK); w_ref: (TK, TN) ([in, out] layout); b_ref: (1, TN)
    # o_ref:   (TM, TN); acc_ref: (TM, TN) float32 accumulator (K-resident)
    k = pl.program_id(2)

    @pl.when(k == 0)
    def _init():
        acc_ref[...] = jnp.zeros_like(acc_ref)

    acc_ref[...] += jnp.dot(
        x_ref[...], w_ref[...], preferred_element_type=jnp.float32
    )

    @pl.when(k == pl.num_programs(2) - 1)
    def _finalize():
        o_ref[...] = (acc_ref[...] + b_ref[...]).astype(o_ref.dtype)


# ---------------------------------------------------------------------------
# Tiling helpers
# ---------------------------------------------------------------------------

def _round_up(v, m):
    return -(-v // m) * m


def _pick_tm(M, tm):
    """M-tile: full extent for small M; otherwise ensure >= 2 M blocks so the
    'parallel' M axis can actually be sharded across v7x's two TensorCores."""
    if M <= 256:
        return M
    TM = min(tm, M)
    if pl.cdiv(M, TM) < 2:
        TM = max(256, _round_up(pl.cdiv(M, 2), 8))
    if TM != M:
        TM = _round_up(TM, 8)
    return TM


def _pick_tk(D, tk):
    """K-tile for the general path. Returns (TK, padded_D) with padded_D % TK
    == 0, so a partial trailing K block (OOB reads -> garbage accumulation)
    can never occur."""
    if D <= tk:
        return D, D
    for cand in (tk, 512, 256, 128):
        if cand <= D and D % cand == 0:
            return cand, D
    Dp = _round_up(D, 128)
    return 128, Dp


def _vmem_limit(est_bytes):
    # Floor at 32 MiB (covers v5e's 16 MiB scoped default), cap at v7x's
    # 64 MiB physical.
    return int(min(max(32 << 20, est_bytes + (est_bytes >> 2)), 64 << 20))


# ---------------------------------------------------------------------------
# Wrapper
# ---------------------------------------------------------------------------

def expert_forward(x, weight, bias, *, tm=512, tn=512, tk=512,
                   compute_dtype=None,
                   weight_resident_bytes=8 * 1024 * 1024):
    """x: [B, S, D]; weight: [D, D] (PyTorch layout, [out, in]); bias: [D]."""
    B, S, D = x.shape
    M = B * S
    out_dtype = x.dtype

    # One-time transpose to [in, out]: the kernel then contracts the standard
    # way (LHS last dim with RHS first dim) — no per-tile transpose on-chip.
    wT = weight.T
    if compute_dtype is not None:
        x = x.astype(compute_dtype)
        wT = wT.astype(compute_dtype)
    x2d = x.reshape(M, D)
    b2d = bias.astype(jnp.float32).reshape(1, D)

    in_isz = jnp.dtype(x2d.dtype).itemsize
    out_isz = jnp.dtype(out_dtype).itemsize
    w_bytes = D * D * jnp.dtype(wT.dtype).itemsize

    TM = _pick_tm(M, tm)

    if w_bytes <= weight_resident_bytes:
        # ---- Path A: weight VMEM-resident, single (parallel) M grid axis. ---
        grid = (pl.cdiv(M, TM),)
        est = (2 * TM * D * in_isz      # x, double-buffered
               + 2 * TM * D * out_isz   # out
               + 2 * w_bytes            # weight (conservative: 2 buffers)
               + 2 * D * 4)             # bias
        out2d = pl.pallas_call(
            _linear_resident_kernel,
            out_shape=jax.ShapeDtypeStruct((M, D), out_dtype),
            grid=grid,
            in_specs=[
                pl.BlockSpec((TM, D), lambda i: (i, 0)),   # streamed x tile
                pl.BlockSpec((D, D), lambda i: (0, 0)),    # constant -> 1 DMA
                pl.BlockSpec((1, D), lambda i: (0, 0)),    # bias row
            ],
            out_specs=pl.BlockSpec((TM, D), lambda i: (i, 0)),
            compiler_params=pltpu.CompilerParams(
                dimension_semantics=("parallel",),
                vmem_limit_bytes=_vmem_limit(est),
            ),
        )(x2d, wT, b2d)
        return out2d.reshape(B, S, D)

    # ---- Path B: general 3-D tiled GEMM (weight too large to stay resident).
    TN = D if D <= tn else tn
    TK, Dp = _pick_tk(D, tk)
    if Dp != D:
        # Zero-pad the contraction dim so the trailing K block contributes
        # exactly zero instead of out-of-bounds garbage.
        x2d = jnp.pad(x2d, ((0, 0), (0, Dp - D)))
        wT = jnp.pad(wT, ((0, Dp - D), (0, 0)))

    grid = (pl.cdiv(M, TM), pl.cdiv(D, TN), Dp // TK)
    est = (2 * TM * TK * in_isz        # x
           + 2 * TK * TN * in_isz      # weight tile
           + 2 * TM * TN * out_isz     # out
           + TM * TN * 4               # f32 accumulator
           + 2 * TN * 4)               # bias

    out2d = pl.pallas_call(
        _linear_tiled_kernel,
        out_shape=jax.ShapeDtypeStruct((M, D), out_dtype),
        grid=grid,
        in_specs=[
            pl.BlockSpec((TM, TK), lambda i, j, k: (i, k)),
            pl.BlockSpec((TK, TN), lambda i, j, k: (k, j)),
            pl.BlockSpec((1, TN), lambda i, j, k: (0, j)),
        ],
        out_specs=pl.BlockSpec((TM, TN), lambda i, j, k: (i, j)),
        scratch_shapes=[pltpu.VMEM((TM, TN), jnp.float32)],
        compiler_params=pltpu.CompilerParams(
            dimension_semantics=("parallel", "parallel", "arbitrary"),
            vmem_limit_bytes=_vmem_limit(est),
        ),
    )(x2d, wT, b2d)
    return out2d.reshape(B, S, D)


# ---------------------------------------------------------------------------
# Reference + tests
# ---------------------------------------------------------------------------

def _reference(x, weight, bias):
    # Same math as torch.nn.Linear: x @ W^T + b on the trailing axis.
    return jnp.einsum("bsd,od->bso", x, weight) + bias


def _make_case(key, b, s, d):
    kx, kw, kb = jax.random.split(key, 3)
    bound = 1.0 / (d ** 0.5)
    x = jax.random.normal(kx, (b, s, d), dtype=jnp.float32)
    w = jax.random.uniform(kw, (d, d), minval=-bound, maxval=bound,
                           dtype=jnp.float32)
    bb = jax.random.uniform(kb, (d,), minval=-bound, maxval=bound,
                            dtype=jnp.float32)
    return x, w, bb


if __name__ == "__main__":
    key = jax.random.PRNGKey(0)
    k0, k1, k2, k3 = jax.random.split(key, 4)

    # ---- 1) Module's native shape: Expert(latent_dim=32, seq_len=8), batch=2.
    #      Weight-resident path, grid=(1,).
    batch, seq_len, latent_dim = 2, 8, 32
    x, w, b = _make_case(k0, batch, seq_len, latent_dim)
    out = jax.block_until_ready(expert_forward(x, w, b))
    ref = _reference(x, w, b)
    assert out.shape == (batch, seq_len, latent_dim)
    assert jnp.allclose(out, ref, atol=1e-5, rtol=1e-5)

    # ---- 2) Weight-resident path with streamed/pipelined M tiles (grid=(2,)).
    x2, w2, b2 = _make_case(k1, 2, 512, 256)
    out2 = jax.block_until_ready(expert_forward(x2, w2, b2))
    assert jnp.allclose(out2, _reference(x2, w2, b2), atol=1e-4, rtol=1e-4)

    # ---- 3) Force the general tiled path (accumulator + K reduction axis).
    x3, w3, b3 = _make_case(k2, 2, 512, 256)
    out3 = jax.block_until_ready(
        expert_forward(x3, w3, b3, tk=128, weight_resident_bytes=0))
    assert jnp.allclose(out3, _reference(x3, w3, b3), atol=1e-4, rtol=1e-4)

    # ---- 4) General path with D not a multiple of the K tile (exercises the
    #         zero-padding guard against OOB accumulation).
    x4, w4, b4 = _make_case(k3, 2, 64, 160)
    out4 = jax.block_until_ready(
        expert_forward(x4, w4, b4, tk=128, weight_resident_bytes=0))
    assert jnp.allclose(out4, _reference(x4, w4, b4), atol=1e-4, rtol=1e-4)

    print("KERNEL_OK")
</pallas_src>

<mosaic_0001>
module attributes {stable_mosaic.version = 11 : i64} {
  func.func @_linear_resident_kernel(%arg0: i32, %arg1: memref<16x32xf32, #tpu.memory_space<vmem>>, %arg2: memref<32x32xf32, #tpu.memory_space<vmem>>, %arg3: memref<1x32xf32, #tpu.memory_space<vmem>>, %arg4: memref<16x32xf32, #tpu.memory_space<vmem>>) attributes {dimension_semantics = [#tpu.dimension_semantics<parallel>], iteration_bounds = array<i64: 1>, scalar_prefetch = 0 : i64, scratch_operands = 0 : i64, tpu.core_type = #tpu.core_type<tc>, window_params = [{transform_indices = @transform_0, window_bounds = array<i64: 16, 32>}, {pipeline_mode = #tpu.pipeline_mode<synchronous>, transform_indices = @transform_1, window_bounds = array<i64: 32, 32>}, {pipeline_mode = #tpu.pipeline_mode<synchronous>, transform_indices = @transform_2, window_bounds = array<i64: 1, 32>}, {transform_indices = @transform_3, window_bounds = array<i64: 16, 32>}]} {
    %c0 = arith.constant 0 : index
    %c0_0 = arith.constant 0 : index
    %0 = vector.load %arg1[%c0, %c0_0] : memref<16x32xf32, #tpu.memory_space<vmem>>, vector<16x32xf32>
    %c0_1 = arith.constant 0 : index
    %c0_2 = arith.constant 0 : index
    %1 = vector.load %arg2[%c0_1, %c0_2] : memref<32x32xf32, #tpu.memory_space<vmem>>, vector<32x32xf32>
    %cst = arith.constant dense<0.000000e+00> : vector<16x32xf32>
    %2 = tpu.matmul %0, %1, %cst {dimension_numbers = #tpu.dot_dimension_numbers<[1], [0], [0], [1], [0, 0, 1, 1], [], []>} : vector<16x32xf32>, vector<32x32xf32>, vector<16x32xf32> -> vector<16x32xf32>
    %c0_3 = arith.constant 0 : index
    %c0_4 = arith.constant 0 : index
    %3 = vector.load %arg3[%c0_3, %c0_4] : memref<1x32xf32, #tpu.memory_space<vmem>>, vector<1x32xf32>
    %4 = vector.broadcast %3 : vector<1x32xf32> to vector<16x32xf32>
    %5 = arith.addf %2, %4 : vector<16x32xf32>
    %c0_5 = arith.constant 0 : index
    %c0_6 = arith.constant 0 : index
    %6 = vector.load %arg4[%c0_5, %c0_6] : memref<16x32xf32, #tpu.memory_space<vmem>>, vector<16x32xf32>
    tpu.vector_store %arg4[%c0_5, %c0_6], %5 {strides = array<i32>} : memref<16x32xf32, #tpu.memory_space<vmem>>, vector<16x32xf32>,
    return
  }
  func.func @transform_0(%arg0: i32) -> (i32, i32) {
    %c0_i32 = arith.constant 0 : i32
    %c0_i32_0 = arith.constant 0 : i32
    return %arg0, %c0_i32 : i32, i32
  }
  func.func @transform_1(%arg0: i32) -> (i32, i32) {
    %c0_i32 = arith.constant 0 : i32
    %c0_i32_0 = arith.constant 0 : i32
    %c0_i32_1 = arith.constant 0 : i32
    return %c0_i32, %c0_i32_0 : i32, i32
  }
  func.func @transform_2(%arg0: i32) -> (i32, i32) {
    %c0_i32 = arith.constant 0 : i32
    %c0_i32_0 = arith.constant 0 : i32
    %c0_i32_1 = arith.constant 0 : i32
    return %c0_i32, %c0_i32_0 : i32, i32
  }
  func.func @transform_3(%arg0: i32) -> (i32, i32) {
    %c0_i32 = arith.constant 0 : i32
    %c0_i32_0 = arith.constant 0 : i32
    return %arg0, %c0_i32 : i32, i32
  }
}

</mosaic_0001>

<llo_original>
// kernel: tpu_custom_call.1
$region0: #{tpu_custom_call.1}
  #allocation0 [shape = 'u32[]', space=smem, size = 0x4, offset = 0x4, fixed_abs, tag = 'smem constant byte address 0x4 - core index']
  #allocation1 [shape = 'u32[72,128]{1,0:T(1,128)}', space=vmem, size = 0x9000, scoped, tag = 'internal scratch']
  %s0 = inlined_call_operand.hbm [shape: f32[16,32], index: 0, kind: input, shape index: {}]
  %s1 = inlined_call_operand.hbm [shape: f32[32,32], index: 1, kind: input, shape index: {}]
  %s2 = inlined_call_operand.vmem [shape: f32[1,32], index: 2, kind: input, shape index: {}]
  %s3 = inlined_call_operand.hbm [shape: f32[16,32], index: 3, kind: output, shape index: {}]
  %s4 = sld [smem:[#allocation0]]
  $region30: #{tpu_custom_call.1} parent=0
    _
  %s6 = ssub.s32 1, %s4
  %s7 = scalar_select 0, %s6, %s4
  $region1: #{tpu_custom_call.1} parent=0
    #allocation2 [shape = 'u8[8192]{0}', space=vmem, size = 0x2000, scoped, tag = 'input window, operand 0, single buffered']
    #allocation3 [shape = 's32[1]{0}', space=sflag, size = 0x4, scoped, tag = 'scoped memory for tpu_custom_call.1']
    #allocation4 [shape = 's32[1]{0}', space=sflag, size = 0x4, scoped, tag = 'scoped memory for tpu_custom_call.1']
    #allocation5 [shape = 'u8[16384]{0}', space=vmem, size = 0x4000, scoped, tag = 'input window, operand 1, single buffered']
    #allocation6 [shape = 's32[1]{0}', space=sflag, size = 0x4, scoped, tag = 'scoped memory for tpu_custom_call.1']
    #allocation7 [shape = 'u8[8192]{0}', space=vmem, size = 0x2000, scoped, tag = 'output window, operand 0, single buffered']
    %8 = vsyncpa [#allocation3], 0
    %9 = vsyncpa [#allocation6], 0
    %10 = vsyncpa [#allocation4], 0
    // Predicated region
    $region2: #{tpu_custom_call.1} parent=1 // pred_check
      _
    $region3: #{tpu_custom_call.1} parent=1 // pred_check_branch
      %12 = sbr.rel (0) target = $region5
    $region4: #{tpu_custom_call.1} parent=1 // pred_region
      %14 = vsyncadd [#allocation3], 0
      %s15 = sshll.u32 %s0, 4
      %s16 = int_to_ptr.hbm [resolvable:$true] %s15
      %s17 = sshll.u32 [#allocation2], 4
      %s18 = int_to_ptr.vmem [resolvable:$true] %s17
      %23 = dma.hbm_to_vmem [thread:$0]  %s16, 256, %s18, [#allocation3], 128, 128, 8
    $region5: #{tpu_custom_call.1} parent=1 // pred_fallthru
      _
    // Predicated region
    $region6: #{tpu_custom_call.1} parent=1 // pred_check
      _
    $region7: #{tpu_custom_call.1} parent=1 // pred_check_branch
      %25 = sbr.rel (0) target = $region9
    $region8: #{tpu_custom_call.1} parent=1 // pred_region
      %27 = vsyncadd [#allocation6], 0
      %s28 = sshll.u32 %s1, 4
      %s29 = int_to_ptr.hbm [resolvable:$true] %s28
      %s30 = sshll.u32 [#allocation5], 4
      %s31 = int_to_ptr.vmem [resolvable:$true] %s30
      %36 = dma.hbm_to_vmem [thread:$0]  %s29, 512, %s31, [#allocation6], 128, 128, 8
    $region9: #{tpu_custom_call.1} parent=1 // pred_fallthru
      _
    // Predicated region
    $region10: #{tpu_custom_call.1} parent=1 // pred_check
      _
    $region11: #{tpu_custom_call.1} parent=1 // pred_check_branch
      %38 = sbr.rel (0) target = $region13
    $region12: #{tpu_custom_call.1} parent=1 // pred_region
      _
    $region13: #{tpu_custom_call.1} parent=1 // pred_fallthru
      _
    // Predicated region
    $region14: #{tpu_custom_call.1} parent=1 // pred_check
      _
    $region15: #{tpu_custom_call.1} parent=1 // pred_check_branch
      %40 = sbr.rel (0) target = $region17
    $region16: #{tpu_custom_call.1} parent=1 // pred_region
      %42 = dma.done [#allocation3], 256
    $region17: #{tpu_custom_call.1} parent=1 // pred_fallthru
      _
    // Predicated region
    $region18: #{tpu_custom_call.1} parent=1 // pred_check
      _
    $region19: #{tpu_custom_call.1} parent=1 // pred_check_branch
      %44 = sbr.rel (0) target = $region21
    $region20: #{tpu_custom_call.1} parent=1 // pred_region
      %46 = dma.done [#allocation6], 512
    $region21: #{tpu_custom_call.1} parent=1 // pred_fallthru
      _
    %v47 = vld [vmem:[#allocation2] sm:$0xff]
    %v48 = vld [vmem:[#allocation2 + $0x8] sm:$0xff]
    %v49 = vld [vmem:[#allocation5] sm:$0xff]
    %v50 = vld [vmem:[#allocation5 + $0x8] sm:$0xff]
    %v51 = vld [vmem:[#allocation5 + $0x10] sm:$0xff]
    %v52 = vld [vmem:[#allocation5 + $0x18] sm:$0xff]
    %v53 = vld [vmem:[%s2] sm:$0x1]
    %v55 = vperm.slane %v53, 0
    %vm57 = vcmask 261120
    %v59 = vsel %vm57, %v47, 0
    %v62 = vsel %vm57, %v48, 0
    %64 = vmatpush.msra.mxu0 0.0
    %65 = vmatpush.msra.mxu0 0.0
    %66 = vmatpush.msra.mxu0 0.0
    %67 = vmatpush.msra.mxu0 0.0
    %68 = vmatpush.msra.mxu0 0.0
    %69 = vmatpush.msra.mxu0 0.0
    %70 = vmatpush.msra.mxu0 0.0
    %71 = vmatpush.msra.mxu0 0.0
    %72 = vmatpush.msra.mxu0 0.0
    %73 = vmatpush.msra.mxu0 0.0
    %74 = vmatpush.msra.mxu0 0.0
    %75 = vmatpush.msra.mxu0 0.0
    %76 = vmatpush.msra.mxu0 %v52
    %77 = vmatpush.msra.mxu0 %v51
    %78 = vmatpush.msra.mxu0 %v50
    %79 = vmatpush.msra.mxu0 %v49
    %80 = vmatmul.f32.gmra.mxu0 %v59
    %v81 = vpop.f32.mrf.mxu0
    %v82 = vadd.f32 %v55, %v81
    %83 = vmatmul.f32.gmra.mxu0 %v62
    %v84 = vpop.f32.mrf.mxu0
    %v85 = vadd.f32 %v55, %v84
    %86 = vdwg.mxu0
    %87 = vst.msk [vmem:[#allocation7] sm:$0xff] %vm57, %v82
    %88 = vst.msk [vmem:[#allocation7 + $0x8] sm:$0xff] %vm57, %v85
    // Predicated region
    $region22: #{tpu_custom_call.1} parent=1 // pred_check
      _
    $region23: #{tpu_custom_call.1} parent=1 // pred_check_branch
      %90 = sbr.rel (0) target = $region25
    $region24: #{tpu_custom_call.1} parent=1 // pred_region
      %92 = vsyncadd [#allocation4], 0
      %s93 = sshll.u32 [#allocation7], 4
      %s94 = int_to_ptr.vmem [resolvable:$true] %s93
      %s95 = sshll.u32 %s3, 4
      %s96 = int_to_ptr.hbm [resolvable:$true] %s95
      %101 = dma.vmem_to_hbm [thread:$0]  %s94, 256, %s96, [#allocation4], 128, 128, 8
    $region25: #{tpu_custom_call.1} parent=1 // pred_fallthru
      _
    // Predicated region
    $region26: #{tpu_custom_call.1} parent=1 // pred_check
      _
    $region27: #{tpu_custom_call.1} parent=1 // pred_check_branch
      %103 = sbr.rel (0) target = $region29
    $region28: #{tpu_custom_call.1} parent=1 // pred_region
      %105 = dma.done [#allocation4], 256
    $region29: #{tpu_custom_call.1} parent=1 // pred_fallthru
      _
    %106 = vsyncpa [#allocation3], 1
    %107 = vsyncpa [#allocation6], 1
    %108 = vsyncpa [#allocation4], 1

</llo_original>
